<compile_context>
chip_gen: v5e
topology: v5e:2x2
jax: 0.10.0
libtpu: 0.0.40
codegen_flags: <defaults>
</compile_context>

<pallas_src>
import functools

import jax
import jax.numpy as jnp
from jax.experimental import pallas as pl
from jax.experimental.pallas import tpu as pltpu

_LANE = 128                              # vreg lane width (last-dim multiple)
_SUBLANE = 8                             # f32 sublane multiple (x/out stay f32)
_VMEM_LIMIT_BYTES = 48 * 1024 * 1024     # fits v5e/v6e (128 MiB) and v7x (64 MiB)


def _round_up(n, m):
    return ((n + m - 1) // m) * m


def mlp_kernel(x_ref, w1_ref, b1_ref, w2_ref, b2_ref, o_ref):
    """One M-tile of: relu(x @ W1 + b1) @ W2 + b2.

    MXU sees bf16 operands with f32 accumulation; bias + ReLU epilogue is f32.
    The hidden activation stays a live value (no VMEM scratch round-trip), so
    Mosaic feeds the second matmul directly from vregs/spill as it sees fit.
    """
    x_bf = x_ref[...].astype(jnp.bfloat16)
    h = jnp.dot(x_bf, w1_ref[...], preferred_element_type=jnp.float32)
    h = jnp.maximum(h + b1_ref[...], 0.0)
    o = jnp.dot(h.astype(jnp.bfloat16), w2_ref[...],
                preferred_element_type=jnp.float32)
    o_ref[...] = (o + b2_ref[...]).astype(o_ref.dtype)


def prepare_mlp_params(w1, b1, w2, b2, weight_dtype=jnp.bfloat16):
    """One-time parameter prep (kept out of the per-call hot path).

    Pads feature dims to the 128-lane width and casts the big matmul operands
    to bf16. Biases stay f32 for the f32 epilogue. Zero padding is exact:
    padded K rows/columns contribute 0 to the dots, padded bias lanes are 0,
    and padded output columns are sliced off after the kernel.
    """
    in_dim, hidden = w1.shape
    out_dim = w2.shape[1]
    in_p = _round_up(in_dim, _LANE)
    hid_p = _round_up(hidden, _LANE)
    out_p = _round_up(out_dim, _LANE)
    w1_p = jnp.pad(w1, ((0, in_p - in_dim), (0, hid_p - hidden))).astype(weight_dtype)
    b1_p = jnp.pad(b1.reshape(1, -1), ((0, 0), (0, hid_p - hidden))).astype(jnp.float32)
    w2_p = jnp.pad(w2, ((0, hid_p - hidden), (0, out_p - out_dim))).astype(weight_dtype)
    b2_p = jnp.pad(b2.reshape(1, -1), ((0, 0), (0, out_p - out_dim))).astype(jnp.float32)
    return w1_p, b1_p, w2_p, b2_p, out_dim


@functools.partial(jax.jit, static_argnames=("out_dim", "tile_m"))
def mlp_forward(x, w1_p, b1_p, w2_p, b2_p, *, out_dim, tile_m=256):
    batch, in_dim = x.shape
    in_p, hid_p = w1_p.shape
    out_p = w2_p.shape[1]
    assert w2_p.shape[0] == hid_p and out_dim <= out_p
    assert b1_p.shape == (1, hid_p) and b2_p.shape == (1, out_p)

    # Keep the M grid long enough (~8 steps when batch allows) so the x/out
    # DMAs pipeline under MXU work and both v7x TensorCores get several steps,
    # while defaulting to a large tile (256) for big batches.
    tile_m = max(_SUBLANE, min(tile_m, _round_up(pl.cdiv(batch, 8), _SUBLANE)))
    m_p = _round_up(batch, tile_m)

    # x is padded only when actually unaligned (weights were pre-padded once).
    if (m_p, in_p) != (batch, in_dim):
        x = jnp.pad(x, ((0, m_p - batch), (0, in_p - in_dim)))

    # Conservative VMEM accounting: assume even the constant-index weight
    # blocks get double-buffered by the pipeline.
    # TODO(synk): pin W1/W2/b1/b2 to a single buffer with
    # pipeline_mode=pl.Buffered(1) once verified on the target jax version.
    w_bytes = jnp.dtype(w1_p.dtype).itemsize
    vmem_bytes = (2 * w_bytes * (in_p * hid_p + hid_p * out_p)   # W1, W2
                  + 2 * 4 * (hid_p + out_p)                      # biases
                  + 2 * 4 * tile_m * (in_p + out_p)              # x/out dbl-buffered
                  + 4 * tile_m * hid_p)                          # f32 hidden value
    assert vmem_bytes < _VMEM_LIMIT_BYTES - 4 * 1024 * 1024, (
        "Tiles exceed the VMEM budget: shrink tile_m or tile the hidden/output "
        "axes with a pl.when-gated accumulator instead of resident weights.")
    # TODO(synk): for production-size MLPs (hidden/out >> 2k), tile the hidden
    # (K2) and output (N2) axes instead of keeping W1/W2 fully resident.

    grid = (m_p // tile_m,)

    out_padded = pl.pallas_call(
        mlp_kernel,
        out_shape=jax.ShapeDtypeStruct((m_p, out_p), x.dtype),
        grid=grid,
        in_specs=[
            pl.BlockSpec((tile_m, in_p), lambda i: (i, 0)),   # streamed x tile
            pl.BlockSpec((in_p, hid_p), lambda i: (0, 0)),    # resident W1 (bf16)
            pl.BlockSpec((1, hid_p), lambda i: (0, 0)),       # resident b1 (f32)
            pl.BlockSpec((hid_p, out_p), lambda i: (0, 0)),   # resident W2 (bf16)
            pl.BlockSpec((1, out_p), lambda i: (0, 0)),       # resident b2 (f32)
        ],
        out_specs=pl.BlockSpec((tile_m, out_p), lambda i: (i, 0)),
        compiler_params=pltpu.CompilerParams(
            # Independent M tiles: pipelined on 1-TC chips, sharded across the
            # two TensorCores on v7x.
            dimension_semantics=("parallel",),
            vmem_limit_bytes=_VMEM_LIMIT_BYTES,
        ),
    )(x, w1_p, b1_p, w2_p, b2_p)

    return out_padded[:batch, :out_dim]


def init_mlp_params(key, input_dim, hidden_dim, output_dim, dtype=jnp.float32):
    # Mirrors nn.Linear's uniform(-1/sqrt(fan_in), 1/sqrt(fan_in)) init.
    k1, k2, k3, k4 = jax.random.split(key, 4)
    lim1 = 1.0 / float(input_dim) ** 0.5
    lim2 = 1.0 / float(hidden_dim) ** 0.5
    w1 = jax.random.uniform(k1, (input_dim, hidden_dim), dtype, -lim1, lim1)
    b1 = jax.random.uniform(k2, (1, hidden_dim), dtype, -lim1, lim1)
    w2 = jax.random.uniform(k3, (hidden_dim, output_dim), dtype, -lim2, lim2)
    b2 = jax.random.uniform(k4, (1, output_dim), dtype, -lim2, lim2)
    return w1, b1, w2, b2


def _ref_mlp_bf16(x, w1_p, b1_p, w2_p, b2_p, out_dim):
    # Plain-JAX mirror of the kernel math (bf16 operands, f32 accumulation).
    in_p = w1_p.shape[0]
    x_p = jnp.pad(x, ((0, 0), (0, in_p - x.shape[1])))
    h = jnp.dot(x_p.astype(jnp.bfloat16), w1_p, preferred_element_type=jnp.float32)
    h = jnp.maximum(h + b1_p, 0.0)
    o = jnp.dot(h.astype(jnp.bfloat16), w2_p, preferred_element_type=jnp.float32)
    return (o + b2_p)[:, :out_dim]


def _ref_mlp_f32(x, w1, b1, w2, b2):
    # Full-precision reference (same math as the PyTorch module).
    h = jnp.maximum(jnp.dot(x, w1, precision=jax.lax.Precision.HIGHEST) + b1, 0.0)
    return jnp.dot(h, w2, precision=jax.lax.Precision.HIGHEST) + b2


if __name__ == "__main__":
    key = jax.random.PRNGKey(0)

    # Lane-aligned sizes: no runtime padding, lane-dense tiles, and the tile_m
    # clamp gives an 8-step M grid so the pipeline is actually exercised.
    batch, input_dim, hidden_dim, output_dim = 256, 128, 256, 128
    kx, kp = jax.random.split(key)
    x = jax.random.normal(kx, (batch, input_dim), jnp.float32)
    w1, b1, w2, b2 = init_mlp_params(kp, input_dim, hidden_dim, output_dim)
    w1_p, b1_p, w2_p, b2_p, odim = prepare_mlp_params(w1, b1, w2, b2)

    out = jax.block_until_ready(
        mlp_forward(x, w1_p, b1_p, w2_p, b2_p, out_dim=odim))
    assert out.shape == (batch, output_dim)
    # Tight check vs. a plain-JAX mirror of the kernel's bf16/f32 math.
    ref_bf = _ref_mlp_bf16(x, w1_p, b1_p, w2_p, b2_p, odim)
    assert jnp.allclose(out, ref_bf, atol=1e-2, rtol=1e-2), float(
        jnp.max(jnp.abs(out - ref_bf)))
    # Looser check vs. the full-f32 PyTorch-equivalent semantics.
    ref_f32 = _ref_mlp_f32(x, w1, b1, w2, b2)
    assert jnp.allclose(out, ref_f32, atol=6e-2, rtol=6e-2), float(
        jnp.max(jnp.abs(out - ref_f32)))

    # Also exercise the zero-padding / ragged-tail path with tiny unaligned dims.
    b_s, i_s, h_s, o_s = 10, 33, 70, 17
    x2 = jax.random.normal(jax.random.PRNGKey(1), (b_s, i_s), jnp.float32)
    p2 = init_mlp_params(jax.random.PRNGKey(2), i_s, h_s, o_s)
    w1_2, b1_2, w2_2, b2_2, odim2 = prepare_mlp_params(*p2)
    out2 = jax.block_until_ready(
        mlp_forward(x2, w1_2, b1_2, w2_2, b2_2, out_dim=odim2))
    assert out2.shape == (b_s, o_s)
    ref2 = _ref_mlp_bf16(x2, w1_2, b1_2, w2_2, b2_2, odim2)
    assert jnp.allclose(out2, ref2, atol=1e-2, rtol=1e-2)

    print("KERNEL_OK")
</pallas_src>

<mosaic_0001>
module attributes {stable_mosaic.version = 11 : i64} {
  func.func @mlp_kernel(%arg0: i32, %arg1: memref<32x128xf32, #tpu.memory_space<vmem>>, %arg2: memref<128x256xbf16, #tpu.memory_space<vmem>>, %arg3: memref<1x256xf32, #tpu.memory_space<vmem>>, %arg4: memref<256x128xbf16, #tpu.memory_space<vmem>>, %arg5: memref<1x128xf32, #tpu.memory_space<vmem>>, %arg6: memref<32x128xf32, #tpu.memory_space<vmem>>) attributes {dimension_semantics = [#tpu.dimension_semantics<parallel>], iteration_bounds = array<i64: 8>, scalar_prefetch = 0 : i64, scratch_operands = 0 : i64, tpu.core_type = #tpu.core_type<tc>, window_params = [{transform_indices = @transform_0, window_bounds = array<i64: 32, 128>}, {pipeline_mode = #tpu.pipeline_mode<synchronous>, transform_indices = @transform_1, window_bounds = array<i64: 128, 256>}, {pipeline_mode = #tpu.pipeline_mode<synchronous>, transform_indices = @transform_2, window_bounds = array<i64: 1, 256>}, {pipeline_mode = #tpu.pipeline_mode<synchronous>, transform_indices = @transform_3, window_bounds = array<i64: 256, 128>}, {pipeline_mode = #tpu.pipeline_mode<synchronous>, transform_indices = @transform_4, window_bounds = array<i64: 1, 128>}, {transform_indices = @transform_5, window_bounds = array<i64: 32, 128>}]} {
    %c0 = arith.constant 0 : index
    %c0_0 = arith.constant 0 : index
    %0 = vector.load %arg1[%c0, %c0_0] : memref<32x128xf32, #tpu.memory_space<vmem>>, vector<32x128xf32>
    %1 = arith.truncf %0 : vector<32x128xf32> to vector<32x128xbf16>
    %c0_1 = arith.constant 0 : index
    %c0_2 = arith.constant 0 : index
    %2 = vector.load %arg2[%c0_1, %c0_2] : memref<128x256xbf16, #tpu.memory_space<vmem>>, vector<128x256xbf16>
    %cst = arith.constant dense<0.000000e+00> : vector<32x256xf32>
    %3 = tpu.matmul %1, %2, %cst {dimension_numbers = #tpu.dot_dimension_numbers<[1], [0], [0], [1], [0, 0, 1, 1], [], []>} : vector<32x128xbf16>, vector<128x256xbf16>, vector<32x256xf32> -> vector<32x256xf32>
    %c0_3 = arith.constant 0 : index
    %c0_4 = arith.constant 0 : index
    %4 = vector.load %arg3[%c0_3, %c0_4] : memref<1x256xf32, #tpu.memory_space<vmem>>, vector<1x256xf32>
    %5 = vector.broadcast %4 : vector<1x256xf32> to vector<32x256xf32>
    %6 = arith.addf %3, %5 : vector<32x256xf32>
    %cst_5 = arith.constant 0.000000e+00 : f32
    %7 = vector.broadcast %cst_5 : f32 to vector<32x256xf32>
    %8 = arith.maximumf %6, %7 : vector<32x256xf32>
    %9 = arith.truncf %8 : vector<32x256xf32> to vector<32x256xbf16>
    %c0_6 = arith.constant 0 : index
    %c0_7 = arith.constant 0 : index
    %10 = vector.load %arg4[%c0_6, %c0_7] : memref<256x128xbf16, #tpu.memory_space<vmem>>, vector<256x128xbf16>
    %cst_8 = arith.constant dense<0.000000e+00> : vector<32x128xf32>
    %11 = tpu.matmul %9, %10, %cst_8 {dimension_numbers = #tpu.dot_dimension_numbers<[1], [0], [0], [1], [0, 0, 1, 1], [], []>} : vector<32x256xbf16>, vector<256x128xbf16>, vector<32x128xf32> -> vector<32x128xf32>
    %c0_9 = arith.constant 0 : index
    %c0_10 = arith.constant 0 : index
    %12 = vector.load %arg5[%c0_9, %c0_10] : memref<1x128xf32, #tpu.memory_space<vmem>>, vector<1x128xf32>
    %13 = vector.broadcast %12 : vector<1x128xf32> to vector<32x128xf32>
    %14 = arith.addf %11, %13 : vector<32x128xf32>
    %c0_11 = arith.constant 0 : index
    %c0_12 = arith.constant 0 : index
    %15 = vector.load %arg6[%c0_11, %c0_12] : memref<32x128xf32, #tpu.memory_space<vmem>>, vector<32x128xf32>
    tpu.vector_store %arg6[%c0_11, %c0_12], %14 {strides = array<i32>} : memref<32x128xf32, #tpu.memory_space<vmem>>, vector<32x128xf32>,
    return
  }
  func.func @transform_0(%arg0: i32) -> (i32, i32) {
    %c0_i32 = arith.constant 0 : i32
    %c0_i32_0 = arith.constant 0 : i32
    return %arg0, %c0_i32 : i32, i32
  }
  func.func @transform_1(%arg0: i32) -> (i32, i32) {
    %c0_i32 = arith.constant 0 : i32
    %c0_i32_0 = arith.constant 0 : i32
    %c0_i32_1 = arith.constant 0 : i32
    return %c0_i32, %c0_i32_0 : i32, i32
  }
  func.func @transform_2(%arg0: i32) -> (i32, i32) {
    %c0_i32 = arith.constant 0 : i32
    %c0_i32_0 = arith.constant 0 : i32
    %c0_i32_1 = arith.constant 0 : i32
    return %c0_i32, %c0_i32_0 : i32, i32
  }
  func.func @transform_3(%arg0: i32) -> (i32, i32) {
    %c0_i32 = arith.constant 0 : i32
    %c0_i32_0 = arith.constant 0 : i32
    %c0_i32_1 = arith.constant 0 : i32
    return %c0_i32, %c0_i32_0 : i32, i32
  }
  func.func @transform_4(%arg0: i32) -> (i32, i32) {
    %c0_i32 = arith.constant 0 : i32
    %c0_i32_0 = arith.constant 0 : i32
    %c0_i32_1 = arith.constant 0 : i32
    return %c0_i32, %c0_i32_0 : i32, i32
  }
  func.func @transform_5(%arg0: i32) -> (i32, i32) {
    %c0_i32 = arith.constant 0 : i32
    %c0_i32_0 = arith.constant 0 : i32
    return %arg0, %c0_i32 : i32, i32
  }
}

</mosaic_0001>

<llo_original>
// kernel: mlp_forward.1
$region0: #{mlp_forward.1}
  #allocation0 [shape = 'u32[]', space=smem, size = 0x4, offset = 0x4, fixed_abs, tag = 'smem constant byte address 0x4 - core index']
  #allocation1 [shape = 'u32[72,128]{1,0:T(1,128)}', space=vmem, size = 0x9000, scoped, tag = 'internal scratch']
  %s0 = inlined_call_operand.hbm [shape: f32[256,128], index: 0, kind: input, shape index: {}]
  %s1 = inlined_call_operand.hbm [shape: bf16[128,256], index: 1, kind: input, shape index: {}]
  %s2 = inlined_call_operand.hbm [shape: f32[1,256], index: 2, kind: input, shape index: {}]
  %s3 = inlined_call_operand.hbm [shape: bf16[256,128], index: 3, kind: input, shape index: {}]
  %s4 = inlined_call_operand.vmem [shape: f32[1,128], index: 4, kind: input, shape index: {}]
  %s5 = inlined_call_operand.hbm [shape: f32[256,128], index: 5, kind: output, shape index: {}]
  %s6 = sld [smem:[#allocation0]]
  $region69: #{mlp_forward.1} parent=0
    _
  %s8 = ssub.s32 1, %s6
  %s9 = scalar_select 0, %s8, %s6
  $region1: #{mlp_forward.1} parent=0
    #allocation2 [shape = 'u8[32768]{0}', space=vmem, size = 0x8000, scoped, tag = 'input window, operand 0']
    #allocation3 [shape = 's32[2]{0}', space=sflag, size = 0x8, scoped, tag = 'scoped memory for mlp_forward.1']
    #allocation4 [shape = 's32[2]{0}', space=sflag, size = 0x8, scoped, tag = 'scoped memory for mlp_forward.1']
    #allocation5 [shape = 'u8[65536]{0}', space=vmem, size = 0x10000, scoped, tag = 'input window, operand 1, single buffered']
    #allocation6 [shape = 's32[1]{0}', space=sflag, size = 0x4, scoped, tag = 'scoped memory for mlp_forward.1']
    #allocation7 [shape = 'u8[1024]{0}', space=vmem, size = 0x400, scoped, tag = 'input window, operand 2, single buffered']
    #allocation8 [shape = 'u8[65536]{0}', space=vmem, size = 0x10000, scoped, tag = 'input window, operand 3, single buffered']
    #allocation9 [shape = 's32[1]{0}', space=sflag, size = 0x4, scoped, tag = 'scoped memory for mlp_forward.1']
    #allocation10 [shape = 'u8[32768]{0}', space=vmem, size = 0x8000, scoped, tag = 'output window, operand 0']
    %10 = vsyncpa [#allocation3], 0
    %s11 = scalar_lea.sflag [#allocation3], 1
    %12 = vsyncpa %s11, 0
    %13 = vsyncpa [#allocation6], 0
    %14 = vsyncpa [#allocation9], 0
    %15 = vsyncpa [#allocation4], 0
    %s16 = scalar_lea.sflag [#allocation4], 1
    %17 = vsyncpa %s16, 0
    loop: start=0, step=1, limit=10
    $region2: #{mlp_forward.1} parent=1 // loop_pre_header
      _
    $region3: #{mlp_forward.1} parent=1 // loop_header
      %s19 = sphi 0, %s23
      %p20 = scmp.ge.s32.totalorder %s19, 10
      %s29 = sphi 0, %s31
      %s32 = sphi 0, %s29
      %s33 = sphi 0, %s32
      %s49 = sphi 0, %s33
      %s53 = sphi 0, %s53
      %s55 = sphi 0, %s53
      %s56 = sphi 0, %s55
      %s70 = sphi 0, %s56
      %s74 = sphi 0, %s74
      %s76 = sphi 0, %s74
      %s77 = sphi 0, %s76
      %s91 = sphi 0, %s77
      %s95 = sphi 0, %s95
      %s97 = sphi 0, %s95
      %s98 = sphi 0, %s97
      %s112 = sphi 0, %s98
      %s116 = sphi 0, %s116
      %s118 = sphi 0, %s116
      %s119 = sphi 0, %s118
      %s133 = sphi 0, %s119
      %s139 = sphi 0, %s141
      %s142 = sphi 0, %s139
      %s143 = sphi 0, %s142
      %s159 = sphi 0, %s143
    $region4: #{mlp_forward.1} parent=1 // loop_header_branch
      %22 = sbr.rel (%p20) target = $region8
    $region5: #{mlp_forward.1} parent=1 // loop_body
      %s24 = ssub.s32 %s19, 1
      %s25 = ssub.s32 %s19, 2
      %s26 = sadd.s32 %s19, 1
      %s27 = ssub.s32 %s19, %s26
      %p28 = scmp.eq.s32.totalorder %s27, 0
      %s30 = sadd.s32 %s29, 1
      %s31 = scalar_select %p28, %s29, %s30
      %p34 = pneg %p28
      %p35 = scmp.eq.s32.totalorder %s19, 7
      %p36 = por %p34, %p35
      %p37 = scmp.ne.s32.totalorder %s29, %s32
      %p38 = scmp.eq.s32.totalorder %s19, 0
      %p39 = por %p37, %p38
      %p40 = scmp.ne.s32.totalorder %s29, %s32
      %p41 = scmp.eq.s32.totalorder %s24, 7
      %p42 = por %p40, %p41
      %p43 = scmp.ne.s32.totalorder %s32, %s33
      %p44 = scmp.eq.s32.totalorder %s24, 0
      %p45 = por %p43, %p44
      %p46 = scmp.ne.s32.totalorder %s32, %s33
      %p47 = scmp.eq.s32.totalorder %s25, 7
      %p48 = por %p46, %p47
      %p50 = scmp.ne.s32.totalorder %s33, %s49
      %p51 = scmp.eq.s32.totalorder %s25, 0
      %p52 = por %p50, %p51
      %s54 = sadd.s32 %s53, 1
      %p57 = scmp.eq.s32.totalorder %s19, 7
      %p58 = scmp.ne.s32.totalorder %s53, %s55
      %p59 = scmp.eq.s32.totalorder %s19, 0
      %p60 = por %p58, %p59
      %p61 = scmp.ne.s32.totalorder %s53, %s55
      %p62 = scmp.eq.s32.totalorder %s24, 7
      %p63 = por %p61, %p62
      %p64 = scmp.ne.s32.totalorder %s55, %s56
      %p65 = scmp.eq.s32.totalorder %s24, 0
      %p66 = por %p64, %p65
      %p67 = scmp.ne.s32.totalorder %s55, %s56
      %p68 = scmp.eq.s32.totalorder %s25, 7
      %p69 = por %p67, %p68
      %p71 = scmp.ne.s32.totalorder %s56, %s70
      %p72 = scmp.eq.s32.totalorder %s25, 0
      %p73 = por %p71, %p72
      %s75 = sadd.s32 %s74, 1
      %p78 = scmp.eq.s32.totalorder %s19, 7
      %p79 = scmp.ne.s32.totalorder %s74, %s76
      %p80 = scmp.eq.s32.totalorder %s19, 0
      %p81 = por %p79, %p80
      %p82 = scmp.ne.s32.totalorder %s74, %s76
      %p83 = scmp.eq.s32.totalorder %s24, 7
      %p84 = por %p82, %p83
      %p85 = scmp.ne.s32.totalorder %s76, %s77
      %p86 = scmp.eq.s32.totalorder %s24, 0
      %p87 = por %p85, %p86
      %p88 = scmp.ne.s32.totalorder %s76, %s77
      %p89 = scmp.eq.s32.totalorder %s25, 7
      %p90 = por %p88, %p89
      %p92 = scmp.ne.s32.totalorder %s77, %s91
      %p93 = scmp.eq.s32.totalorder %s25, 0
      %p94 = por %p92, %p93
      %s96 = sadd.s32 %s95, 1
      %p99 = scmp.eq.s32.totalorder %s19, 7
      %p100 = scmp.ne.s32.totalorder %s95, %s97
      %p101 = scmp.eq.s32.totalorder %s19, 0
      %p102 = por %p100, %p101
      %p103 = scmp.ne.s32.totalorder %s95, %s97
      %p104 = scmp.eq.s32.totalorder %s24, 7
      %p105 = por %p103, %p104
      %p106 = scmp.ne.s32.totalorder %s97, %s98
      %p107 = scmp.eq.s32.totalorder %s24, 0
      %p108 = por %p106, %p107
      %p109 = scmp.ne.s32.totalorder %s97, %s98
      %p110 = scmp.eq.s32.totalorder %s25, 7
      %p111 = por %p109, %p110
      %p113 = scmp.ne.s32.totalorder %s98, %s112
      %p114 = scmp.eq.s32.totalorder %s25, 0
      %p115 = por %p113, %p114
      %s117 = sadd.s32 %s116, 1
      %p120 = scmp.eq.s32.totalorder %s19, 7
      %p121 = scmp.ne.s32.totalorder %s116, %s118
      %p122 = scmp.eq.s32.totalorder %s19, 0
      %p123 = por %p121, %p122
      %p124 = scmp.ne.s32.totalorder %s116, %s118
      %p125 = scmp.eq.s32.totalorder %s24, 7
      %p126 = por %p124, %p125
      %p127 = scmp.ne.s32.totalorder %s118, %s119
      %p128 = scmp.eq.s32.totalorder %s24, 0
      %p129 = por %p127, %p128
      %p130 = scmp.ne.s32.totalorder %s118, %s119
      %p131 = scmp.eq.s32.totalorder %s25, 7
      %p132 = por %p130, %p131
      %p134 = scmp.ne.s32.totalorder %s119, %s133
      %p135 = scmp.eq.s32.totalorder %s25, 0
      %p136 = por %p134, %p135
      %s137 = ssub.s32 %s19, %s26
      %p138 = scmp.eq.s32.totalorder %s137, 0
      %s140 = sadd.s32 %s139, 1
      %s141 = scalar_select %p138, %s139, %s140
      %p144 = pneg %p138
      %p145 = scmp.eq.s32.totalorder %s19, 7
      %p146 = por %p144, %p145
      %p147 = scmp.ne.s32.totalorder %s139, %s142
      %p148 = scmp.eq.s32.totalorder %s19, 0
      %p149 = por %p147, %p148
      %p150 = scmp.ne.s32.totalorder %s139, %s142
      %p151 = scmp.eq.s32.totalorder %s24, 7
      %p152 = por %p150, %p151
      %p153 = scmp.ne.s32.totalorder %s142, %s143
      %p154 = scmp.eq.s32.totalorder %s24, 0
      %p155 = por %p153, %p154
      %p156 = scmp.ne.s32.totalorder %s142, %s143
      %p157 = scmp.eq.s32.totalorder %s25, 7
      %p158 = por %p156, %p157
      %p160 = scmp.ne.s32.totalorder %s143, %s159
      %p161 = scmp.eq.s32.totalorder %s25, 0
      %p162 = por %p160, %p161
      %p163 = scmp.le.s32.totalorder 1, %s19
      %p164 = scmp.lt.s32.totalorder %s19, 9
      %p165 = pnand %p163, %p164
      %p166 = pneg %p165
      // Predicated region
      $region9: #{mlp_forward.1} parent=5 // pred_check
        _
      $region10: #{mlp_forward.1} parent=5 // pred_check_branch
        %168 = sbr.rel (%p165) target = $region12
      $region11: #{mlp_forward.1} parent=5 // pred_region
        %s169 = ssub.s32 %s19, 1
        // Predicated region
        $region13: #{mlp_forward.1} parent=11 // pred_check
          %p170 = pneg %p66
        $region14: #{mlp_forward.1} parent=11 // pred_check_branch
          %172 = sbr.rel (%p170) target = $region16
        $region15: #{mlp_forward.1} parent=11 // pred_region
          %174 = vsyncadd [#allocation6], 0
          %s175 = sshll.u32 %s1, 4
          %s176 = int_to_ptr.hbm [resolvable:$true] %s175
          %s177 = sshll.u32 [#allocation5], 4
          %s178 = int_to_ptr.vmem [resolvable:$true] %s177
          %183 = dma.hbm_to_vmem [thread:$0]  %s176, 2048, %s178, [#allocation6], 128, 128, 8
        $region16: #{mlp_forward.1} parent=11 // pred_fallthru
          _
        // Predicated region
        $region17: #{mlp_forward.1} parent=11 // pred_check
          %p184 = pneg %p87
        $region18: #{mlp_forward.1} parent=11 // pred_check_branch
          %186 = sbr.rel (%p184) target = $region20
        $region19: #{mlp_forward.1} parent=11 // pred_region
          %188 = vsyncadd [#allocation6], 0
          %s190 = sshll.u32 %s2, 4
          %s191 = int_to_ptr.hbm [resolvable:$true] %s190
          %s192 = sshll.u32 [#allocation7], 4
          %s193 = int_to_ptr.vmem [resolvable:$true] %s192
          %195 = dma.hbm_to_vmem [thread:$0]  %s191, 32, %s193, [#allocation6]
        $region20: #{mlp_forward.1} parent=11 // pred_fallthru
          _
        // Predicated region
        $region21: #{mlp_forward.1} parent=11 // pred_check
          %p196 = pneg %p108
        $region22: #{mlp_forward.1} parent=11 // pred_check_branch
          %198 = sbr.rel (%p196) target = $region24
        $region23: #{mlp_forward.1} parent=11 // pred_region
          %200 = vsyncadd [#allocation9], 0
          %s201 = sshll.u32 %s3, 4
          %s202 = int_to_ptr.hbm [resolvable:$true] %s201
          %s203 = sshll.u32 [#allocation8], 4
          %s204 = int_to_ptr.vmem [resolvable:$true] %s203
          %209 = dma.hbm_to_vmem [thread:$0]  %s202, 2048, %s204, [#allocation9], 64, 64, 4
        $region24: #{mlp_forward.1} parent=11 // pred_fallthru
          _
        // Predicated region
        $region25: #{mlp_forward.1} parent=11 // pred_check
          %p210 = pneg %p129
        $region26: #{mlp_forward.1} parent=11 // pred_check_branch
          %212 = sbr.rel (%p210) target = $region28
        $region27: #{mlp_forward.1} parent=11 // pred_region
          _
        $region28: #{mlp_forward.1} parent=11 // pred_fallthru
          _
      $region12: #{mlp_forward.1} parent=5 // pred_fallthru
        _
      %p213 = scmp.lt.s32.totalorder %s19, 8
      // Predicated region
      $region29: #{mlp_forward.1} parent=5 // pred_check
        %p214 = pneg %p213
      $region30: #{mlp_forward.1} parent=5 // pred_check_branch
        %216 = sbr.rel (%p214) target = $region32
      $region31: #{mlp_forward.1} parent=5 // pred_region
        // Predicated region
        $region33: #{mlp_forward.1} parent=31 // pred_check
          %p217 = pneg %p39
        $region34: #{mlp_forward.1} parent=31 // pred_check_branch
          %219 = sbr.rel (%p217) target = $region36
        $region35: #{mlp_forward.1} parent=31 // pred_region
          %s220 = sand.u32 %s29, 1
          %s221 = scalar_lea.sflag [#allocation3], %s220
          %s222 = sand.u32 %s29, 1
          %s223 = smul.addr %s222, 32
          %s224 = scalar_lea.vmem [#allocation2], %s223
          %s225 = smul.u32 4, %s19
          %227 = vsyncadd %s221, 0
          %s228 = smul.addr %s225, 8
          %s229 = scalar_lea.hbm %s0, %s228
          %s230 = sshll.u32 %s229, 4
          %s231 = int_to_ptr.hbm [resolvable:$true] %s230
          %s232 = sshll.u32 %s224, 4
          %s233 = int_to_ptr.vmem [resolvable:$true] %s232
          %238 = dma.hbm_to_vmem [thread:$0]  %s231, 512, %s233, %s221, 128, 128, 8
        $region36: #{mlp_forward.1} parent=31 // pred_fallthru
          _
      $region32: #{mlp_forward.1} parent=5 // pred_fallthru
        _
      %p239 = scmp.le.s32.totalorder 1, %s19
      %p240 = scmp.lt.s32.totalorder %s19, 9
      %p241 = pnand %p239, %p240
      %p242 = pneg %p241
      // Predicated region
      $region37: #{mlp_forward.1} parent=5 // pred_check
        _
      $region38: #{mlp_forward.1} parent=5 // pred_check_branch
        %244 = sbr.rel (%p241) target = $region40
      $region39: #{mlp_forward.1} parent=5 // pred_region
        %s245 = ssub.s32 %s19, 1
        %s246 = sand.u32 %s32, 1
        %s247 = scalar_lea.sflag [#allocation3], %s246
        %s248 = sand.u32 %s32, 1
        %s249 = smul.addr %s248, 32
        %s250 = scalar_lea.vmem [#allocation2], %s249
        // Predicated region
        $region41: #{mlp_forward.1} parent=39 // pred_check
          %p251 = pneg %p45
        $region42: #{mlp_forward.1} parent=39 // pred_check_branch
          %253 = sbr.rel (%p251) target = $region44
        $region43: #{mlp_forward.1} parent=39 // pred_region
          %255 = dma.done %s247, 512
        $region44: #{mlp_forward.1} parent=39 // pred_fallthru
          _
        // Predicated region
        $region45: #{mlp_forward.1} parent=39 // pred_check
          %p256 = pneg %p66
        $region46: #{mlp_forward.1} parent=39 // pred_check_branch
          %258 = sbr.rel (%p256) target = $region48
        $region47: #{mlp_forward.1} parent=39 // pred_region
          %260 = dma.done [#allocation6], 2048
        $region48: #{mlp_forward.1} parent=39 // pred_fallthru
          _
        // Predicated region
        $region49: #{mlp_forward.1} parent=39 // pred_check
          %p261 = pneg %p87
        $region50: #{mlp_forward.1} parent=39 // pred_check_branch
          %263 = sbr.rel (%p261) target = $region52
        $region51: #{mlp_forward.1} parent=39 // pred_region
          %265 = dma.done [#allocation6], 32
        $region52: #{mlp_forward.1} parent=39 // pred_fallthru
          _
        // Predicated region
        $region53: #{mlp_forward.1} parent=39 // pred_check
          %p266 = pneg %p108
        $region54: #{mlp_forward.1} parent=39 // pred_check_branch
          %268 = sbr.rel (%p266) target = $region56
        $region55: #{mlp_forward.1} parent=39 // pred_region
          %270 = dma.done [#allocation9], 2048
        $region56: #{mlp_forward.1} parent=39 // pred_fallthru
          _
        %s271 = sand.u32 %s32, 1
        %s272 = scalar_lea.sflag [#allocation3], %s271
        %s273 = sand.u32 %s32, 1
        %s274 = smul.addr %s273, 32
        %s275 = scalar_lea.vmem [#allocation2], %s274
        %p276 = pneg %p45
        %p277 = pneg %p42
        %p278 = pneg %p66
        %p279 = pneg %p63
        %p280 = pneg %p87
        %p281 = pneg %p84
        %p282 = pneg %p108
        %p283 = pneg %p105
        %p284 = pneg %p129
        %p285 = pneg %p126
        %p286 = pneg %p155
        %p287 = pneg %p152
        %s288 = sand.u32 %s142, 1
        %s289 = scalar_lea.sflag [#allocation4], %s288
        %s290 = sand.u32 %s142, 1
        %s291 = smul.addr %s290, 32
        %s292 = scalar_lea.vmem [#allocation10], %s291
        %s293 = smul.u32 4, %s24
        %s294 = smul.u32 4, %s24
        %v295 = vld [vmem:[%s250] sm:$0xff]
        %v296 = vld [vmem:[%s250 + $0x8] sm:$0xff]
        %v297 = vld [vmem:[%s250 + $0x10] sm:$0xff]
        %v298 = vld [vmem:[%s250 + $0x18] sm:$0xff]
        %v299 = vpack.c.bf16 %v296, %v295
        %v300 = vpack.c.bf16 %v298, %v297
        %v301 = vld [vmem:[#allocation5] sm:$0xff]
        %v302 = vld [vmem:[#allocation5 + $0x8] sm:$0xff]
        %v303 = vld [vmem:[#allocation5 + $0x10] sm:$0xff]
        %v304 = vld [vmem:[#allocation5 + $0x18] sm:$0xff]
        %v305 = vld [vmem:[#allocation5 + $0x20] sm:$0xff]
        %v306 = vld [vmem:[#allocation5 + $0x28] sm:$0xff]
        %v307 = vld [vmem:[#allocation5 + $0x30] sm:$0xff]
        %v308 = vld [vmem:[#allocation5 + $0x38] sm:$0xff]
        %v309 = vld [vmem:[#allocation5 + $0x40] sm:$0xff]
        %v310 = vld [vmem:[#allocation5 + $0x48] sm:$0xff]
        %v311 = vld [vmem:[#allocation5 + $0x50] sm:$0xff]
        %v312 = vld [vmem:[#allocation5 + $0x58] sm:$0xff]
        %v313 = vld [vmem:[#allocation5 + $0x60] sm:$0xff]
        %v314 = vld [vmem:[#allocation5 + $0x68] sm:$0xff]
        %v315 = vld [vmem:[#allocation5 + $0x70] sm:$0xff]
        %v316 = vld [vmem:[#allocation5 + $0x78] sm:$0xff]
        %v317 = vld [vmem:[#allocation7] sm:$0x3]
        %v319 = vperm.slane %v317, 0
        %v320 = vperm.slane %v317, 1
        %v339 = vunpack.c.l.b16 %v301
        %v340 = vunpack.c.h.b16 %v301
        %v341 = vunpack.c.l.b16 %v302
        %v342 = vunpack.c.h.b16 %v302
        %v343 = vunpack.c.l.b16 %v303
        %v344 = vunpack.c.h.b16 %v303
        %v345 = vunpack.c.l.b16 %v304
        %v346 = vunpack.c.h.b16 %v304
        %v347 = vunpack.c.l.b16 %v305
        %v348 = vunpack.c.h.b16 %v305
        %v349 = vunpack.c.l.b16 %v306
        %v350 = vunpack.c.h.b16 %v306
        %v351 = vunpack.c.l.b16 %v307
        %v352 = vunpack.c.h.b16 %v307
        %v353 = vunpack.c.l.b16 %v308
        %v354 = vunpack.c.h.b16 %v308
        %v355 = vunpack.c.l.b16 %v309
        %v356 = vunpack.c.h.b16 %v309
        %v357 = vunpack.c.l.b16 %v310
        %v358 = vunpack.c.h.b16 %v310
        %v359 = vunpack.c.l.b16 %v311
        %v360 = vunpack.c.h.b16 %v311
        %v361 = vunpack.c.l.b16 %v312
        %v362 = vunpack.c.h.b16 %v312
        %v363 = vunpack.c.l.b16 %v313
        %v364 = vunpack.c.h.b16 %v313
        %v365 = vunpack.c.l.b16 %v314
        %v366 = vunpack.c.h.b16 %v314
        %v367 = vunpack.c.l.b16 %v315
        %v368 = vunpack.c.h.b16 %v315
        %v369 = vunpack.c.l.b16 %v316
        %v370 = vunpack.c.h.b16 %v316
        %v371 = vpack.c.b16 %v341, %v339
        %v372 = vpack.c.b16 %v342, %v340
        %v373 = vpack.c.b16 %v345, %v343
        %v374 = vpack.c.b16 %v346, %v344
        %v375 = vpack.c.b16 %v349, %v347
        %v376 = vpack.c.b16 %v350, %v348
        %v377 = vpack.c.b16 %v353, %v351
        %v378 = vpack.c.b16 %v354, %v352
        %v379 = vpack.c.b16 %v357, %v355
        %v380 = vpack.c.b16 %v358, %v356
        %v381 = vpack.c.b16 %v361, %v359
        %v382 = vpack.c.b16 %v362, %v360
        %v383 = vpack.c.b16 %v365, %v363
        %v384 = vpack.c.b16 %v366, %v364
        %v385 = vpack.c.b16 %v369, %v367
        %v386 = vpack.c.b16 %v370, %v368
        %403 = vmatpush.bf16.msra.mxu0 %v385
        %404 = vmatpush.bf16.msra.mxu0 %v383
        %405 = vmatpush.bf16.msra.mxu0 %v381
        %406 = vmatpush.bf16.msra.mxu0 %v379
        %407 = vmatpush.bf16.msra.mxu0 %v377
        %408 = vmatpush.bf16.msra.mxu0 %v375
        %409 = vmatpush.bf16.msra.mxu0 %v373
        %410 = vmatpush.bf16.msra.mxu0 %v371
        %411 = vmatmul.bf16.gmra.mxu0 %v299
        %v412 = vpop.f32.mrf.mxu0
        %v413 = vadd.f32 %v319, %v412
        %v414 = vpop.f32.mrf.mxu0
        %v415 = vadd.f32 %v319, %v414
        %416 = vmatmul.bf16.gmra.mxu0 %v300
        %v417 = vpop.f32.mrf.mxu0
        %v418 = vadd.f32 %v319, %v417
        %v419 = vpop.f32.mrf.mxu0
        %v420 = vadd.f32 %v319, %v419
        %421 = vdwg.mxu0
        %422 = vmatpush.bf16.msra.mxu0 %v386
        %423 = vmatpush.bf16.msra.mxu0 %v384
        %424 = vmatpush.bf16.msra.mxu0 %v382
        %425 = vmatpush.bf16.msra.mxu0 %v380
        %426 = vmatpush.bf16.msra.mxu0 %v378
        %427 = vmatpush.bf16.msra.mxu0 %v376
        %428 = vmatpush.bf16.msra.mxu0 %v374
        %429 = vmatpush.bf16.msra.mxu0 %v372
        %430 = vmatmul.bf16.gmra.mxu0 %v299
        %v431 = vpop.f32.mrf.mxu0
        %v432 = vadd.f32 %v320, %v431
        %v433 = vpop.f32.mrf.mxu0
        %v434 = vadd.f32 %v320, %v433
        %435 = vmatmul.bf16.gmra.mxu0 %v300
        %v436 = vpop.f32.mrf.mxu0
        %v437 = vadd.f32 %v320, %v436
        %v438 = vpop.f32.mrf.mxu0
        %v439 = vadd.f32 %v320, %v438
        %440 = vdwg.mxu0
        %v441 = vmax.f32 %v413, 0.0
        %v442 = vmax.f32 %v432, 0.0
        %v443 = vmax.f32 %v415, 0.0
        %v444 = vmax.f32 %v434, 0.0
        %v445 = vmax.f32 %v418, 0.0
        %v446 = vmax.f32 %v437, 0.0
        %v447 = vmax.f32 %v420, 0.0
        %v448 = vmax.f32 %v439, 0.0
        %v449 = vpack.c.bf16 %v443, %v441
        %v450 = vpack.c.bf16 %v444, %v442
        %v451 = vpack.c.bf16 %v447, %v445
        %v452 = vpack.c.bf16 %v448, %v446
        %v453 = vld [vmem:[#allocation8] sm:$0xf]
        %v454 = vld [vmem:[#allocation8 + $0x4] sm:$0xf]
        %v455 = vld [vmem:[#allocation8 + $0x8] sm:$0xf]
        %v456 = vld [vmem:[#allocation8 + $0xc] sm:$0xf]
        %v457 = vld [vmem:[#allocation8 + $0x10] sm:$0xf]
        %v458 = vld [vmem:[#allocation8 + $0x14] sm:$0xf]
        %v459 = vld [vmem:[#allocation8 + $0x18] sm:$0xf]
        %v460 = vld [vmem:[#allocation8 + $0x1c] sm:$0xf]
        %v461 = vld [vmem:[#allocation8 + $0x20] sm:$0xf]
        %v462 = vld [vmem:[#allocation8 + $0x24] sm:$0xf]
        %v463 = vld [vmem:[#allocation8 + $0x28] sm:$0xf]
        %v464 = vld [vmem:[#allocation8 + $0x2c] sm:$0xf]
        %v465 = vld [vmem:[#allocation8 + $0x30] sm:$0xf]
        %v466 = vld [vmem:[#allocation8 + $0x34] sm:$0xf]
        %v467 = vld [vmem:[#allocation8 + $0x38] sm:$0xf]
        %v468 = vld [vmem:[#allocation8 + $0x3c] sm:$0xf]
        %v469 = vld [vmem:[#allocation8 + $0x40] sm:$0xf]
        %v470 = vld [vmem:[#allocation8 + $0x44] sm:$0xf]
        %v471 = vld [vmem:[#allocation8 + $0x48] sm:$0xf]
        %v472 = vld [vmem:[#allocation8 + $0x4c] sm:$0xf]
        %v473 = vld [vmem:[#allocation8 + $0x50] sm:$0xf]
        %v474 = vld [vmem:[#allocation8 + $0x54] sm:$0xf]
        %v475 = vld [vmem:[#allocation8 + $0x58] sm:$0xf]
        %v476 = vld [vmem:[#allocation8 + $0x5c] sm:$0xf]
        %v477 = vld [vmem:[#allocation8 + $0x60] sm:$0xf]
        %v478 = vld [vmem:[#allocation8 + $0x64] sm:$0xf]
        %v479 = vld [vmem:[#allocation8 + $0x68] sm:$0xf]
        %v480 = vld [vmem:[#allocation8 + $0x6c] sm:$0xf]
        %v481 = vld [vmem:[#allocation8 + $0x70] sm:$0xf]
        %v482 = vld [vmem:[#allocation8 + $0x74] sm:$0xf]
        %v483 = vld [vmem:[#allocation8 + $0x78] sm:$0xf]
        %v484 = vld [vmem:[#allocation8 + $0x7c] sm:$0xf]
        %v485 = vld [vmem:[%s4] sm:$0x1]
        %v487 = vperm.slane %v485, 0
        %v521 = vunpack.c.l.b16 %v453
        %v522 = vunpack.c.l.b16 %v454
        %v523 = vunpack.c.l.b16 %v455
        %v524 = vunpack.c.l.b16 %v456
        %v525 = vunpack.c.l.b16 %v457
        %v526 = vunpack.c.l.b16 %v458
        %v527 = vunpack.c.l.b16 %v459
        %v528 = vunpack.c.l.b16 %v460
        %v529 = vunpack.c.l.b16 %v461
        %v530 = vunpack.c.l.b16 %v462
        %v531 = vunpack.c.l.b16 %v463
        %v532 = vunpack.c.l.b16 %v464
        %v533 = vunpack.c.l.b16 %v465
        %v534 = vunpack.c.l.b16 %v466
        %v535 = vunpack.c.l.b16 %v467
        %v536 = vunpack.c.l.b16 %v468
        %v537 = vunpack.c.l.b16 %v469
        %v538 = vunpack.c.l.b16 %v470
        %v539 = vunpack.c.l.b16 %v471
        %v540 = vunpack.c.l.b16 %v472
        %v541 = vunpack.c.l.b16 %v473
        %v542 = vunpack.c.l.b16 %v474
        %v543 = vunpack.c.l.b16 %v475
        %v544 = vunpack.c.l.b16 %v476
        %v545 = vunpack.c.l.b16 %v477
        %v546 = vunpack.c.l.b16 %v478
        %v547 = vunpack.c.l.b16 %v479
        %v548 = vunpack.c.l.b16 %v480
        %v549 = vunpack.c.l.b16 %v481
        %v550 = vunpack.c.l.b16 %v482
        %v551 = vunpack.c.l.b16 %v483
        %v552 = vunpack.c.l.b16 %v484
        %v553 = vpack.c.b16 %v522, %v521
        %v554 = vpack.c.b16 %v524, %v523
        %v555 = vpack.c.b16 %v526, %v525
        %v556 = vpack.c.b16 %v528, %v527
        %v557 = vpack.c.b16 %v530, %v529
        %v558 = vpack.c.b16 %v532, %v531
        %v559 = vpack.c.b16 %v534, %v533
        %v560 = vpack.c.b16 %v536, %v535
        %v561 = vpack.c.b16 %v538, %v537
        %v562 = vpack.c.b16 %v540, %v539
        %v563 = vpack.c.b16 %v542, %v541
        %v564 = vpack.c.b16 %v544, %v543
        %v565 = vpack.c.b16 %v546, %v545
        %v566 = vpack.c.b16 %v548, %v547
        %v567 = vpack.c.b16 %v550, %v549
        %v568 = vpack.c.b16 %v552, %v551
        %585 = vmatpush.bf16.msra.mxu0 %v560
        %586 = vmatpush.bf16.msra.mxu0 %v559
        %587 = vmatpush.bf16.msra.mxu0 %v558
        %588 = vmatpush.bf16.msra.mxu0 %v557
        %589 = vmatpush.bf16.msra.mxu0 %v556
        %590 = vmatpush.bf16.msra.mxu0 %v555
        %591 = vmatpush.bf16.msra.mxu0 %v554
        %592 = vmatpush.bf16.msra.mxu0 %v553
        %593 = vmatmul.bf16.gmra.mxu0 %v449
        %v594 = vpop.f32.mrf.mxu0
        %v595 = vadd.f32 %v487, %v594
        %v596 = vpop.f32.mrf.mxu0
        %v597 = vadd.f32 %v487, %v596
        %598 = vmatmul.bf16.gmra.mxu0 %v451
        %v599 = vpop.f32.mrf.mxu0
        %v600 = vadd.f32 %v487, %v599
        %v601 = vpop.f32.mrf.mxu0
        %v602 = vadd.f32 %v487, %v601
        %603 = vdwg.mxu0
        %604 = vmatpush.bf16.msra.mxu0 %v568
        %605 = vmatpush.bf16.msra.mxu0 %v567
        %606 = vmatpush.bf16.msra.mxu0 %v566
        %607 = vmatpush.bf16.msra.mxu0 %v565
        %608 = vmatpush.bf16.msra.mxu0 %v564
        %609 = vmatpush.bf16.msra.mxu0 %v563
        %610 = vmatpush.bf16.msra.mxu0 %v562
        %611 = vmatpush.bf16.msra.mxu0 %v561
        %612 = vmatmul.bf16.gmra.mxu0 %v450
        %v613 = vpop.f32.mrf.mxu0
        %v614 = vadd.f32 %v595, %v613
        %v615 = vpop.f32.mrf.mxu0
        %v616 = vadd.f32 %v597, %v615
        %617 = vmatmul.bf16.gmra.mxu0 %v452
        %v618 = vpop.f32.mrf.mxu0
        %v619 = vadd.f32 %v600, %v618
        %v620 = vpop.f32.mrf.mxu0
        %v621 = vadd.f32 %v602, %v620
        %622 = vdwg.mxu0
        %623 = vst [vmem:[%s292] sm:$0xff] %v614
        %624 = vst [vmem:[%s292 + $0x8] sm:$0xff] %v616
        %625 = vst [vmem:[%s292 + $0x10] sm:$0xff] %v619
        %626 = vst [vmem:[%s292 + $0x18] sm:$0xff] %v621
        %s627 = sand.u32 %s142, 1
        %s628 = scalar_lea.sflag [#allocation4], %s627
        %s629 = sand.u32 %s142, 1
        %s630 = smul.addr %s629, 32
        %s631 = scalar_lea.vmem [#allocation10], %s630
        // Predicated region
        $region57: #{mlp_forward.1} parent=39 // pred_check
          %p632 = pneg %p152
        $region58: #{mlp_forward.1} parent=39 // pred_check_branch
          %634 = sbr.rel (%p632) target = $region60
        $region59: #{mlp_forward.1} parent=39 // pred_region
          %s635 = smul.u32 4, %s24
          %637 = vsyncadd %s628, 0
          %s638 = smul.addr %s635, 8
          %s639 = scalar_lea.hbm %s5, %s638
          %s640 = sshll.u32 %s631, 4
          %s641 = int_to_ptr.vmem [resolvable:$true] %s640
          %s642 = sshll.u32 %s639, 4
          %s643 = int_to_ptr.hbm [resolvable:$true] %s642
          %648 = dma.vmem_to_hbm [thread:$0]  %s641, 512, %s643, %s628, 128, 128, 8
        $region60: #{mlp_forward.1} parent=39 // pred_fallthru
          _
      $region40: #{mlp_forward.1} parent=5 // pred_fallthru
        _
      %p649 = scmp.le.s32.totalorder 2, %s19
      // Predicated region
      $region61: #{mlp_forward.1} parent=5 // pred_check
        %p650 = pneg %p649
      $region62: #{mlp_forward.1} parent=5 // pred_check_branch
        %652 = sbr.rel (%p650) target = $region64
      $region63: #{mlp_forward.1} parent=5 // pred_region
        %s653 = ssub.s32 %s19, 2
        // Predicated region
        $region65: #{mlp_forward.1} parent=63 // pred_check
          %p654 = pneg %p158
        $region66: #{mlp_forward.1} parent=63 // pred_check_branch
          %656 = sbr.rel (%p654) target = $region68
        $region67: #{mlp_forward.1} parent=63 // pred_region
          %s657 = sand.u32 %s143, 1
          %s658 = scalar_lea.sflag [#allocation4], %s657
          %s659 = sand.u32 %s143, 1
          %s660 = smul.addr %s659, 32
          %s661 = scalar_lea.vmem [#allocation10], %s660
          %663 = dma.done %s658, 512
        $region68: #{mlp_forward.1} parent=63 // pred_fallthru
          _
      $region64: #{mlp_forward.1} parent=5 // pred_fallthru
        _
    $region6: #{mlp_forward.1} parent=1 // loop_footer
      %s23 = sadd.s32 1, %s19
    $region7: #{mlp_forward.1} parent=1 // loop_footer_branch
      %18 = sbr.rel target = $region3
    $region8: #{mlp_forward.1} parent=1 // loop_exit
      _
    %664 = vsyncpa [#allocation3], 1
    %s665 = scalar_lea.sflag [#allocation3], 1
    %666 = vsyncpa %s665, 1
    %667 = vsyncpa [#allocation6], 1
    %668 = vsyncpa [#allocation9], 1
    %669 = vsyncpa [#allocation4], 1
    %s670 = scalar_lea.sflag [#allocation4], 1
    %671 = vsyncpa %s670, 1

</llo_original>
